<compile_context>
chip_gen: v7x
topology: tpu7x:2x2x1
jax: 0.10.0
libtpu: 0.0.40
codegen_flags: <defaults>
</compile_context>

<pallas_src>
import jax
import jax.numpy as jnp
from jax.experimental import pallas as pl
from jax.experimental.pallas import tpu as pltpu


# ----------------------------- Pallas kernels --------------------------------
def _conv1x1_vpu_kernel(x_ref, w_ref, b_ref, o_ref):
    """Small-channel path: out[co, s, l] = sum_ci w[co,ci] * x[ci,s,l] + b[co].

    x_ref: (c_in,  S, 128) VMEM
    w_ref: (c_out, c_in)   SMEM  (scalar reads, broadcast onto the VPU)
    b_ref: (c_out,)        SMEM
    o_ref: (c_out, S, 128) VMEM  (lane-dense stores)
    """
    c_in = x_ref.shape[0]
    c_out = o_ref.shape[0]
    acc = [None] * c_out
    # ci-outer: each input channel slice is loaded / cast to f32 exactly once.
    for ci in range(c_in):
        xci = x_ref[ci, :, :].astype(jnp.float32)
        for co in range(c_out):
            if ci == 0:
                acc[co] = xci * w_ref[co, 0] + b_ref[co]   # bias folded into init
            else:
                acc[co] = acc[co] + xci * w_ref[co, ci]
    for co in range(c_out):
        o_ref[co, :, :] = acc[co].astype(o_ref.dtype)
    # TODO(synk): on v6e/v7x a bf16-activation variant could keep the multiplies
    # in bf16 and only widen for the accumulate (halves VALU work / vreg pressure).


def _conv1x1_mxu_kernel(x_ref, w_ref, b_ref, o_ref):
    """Large-channel path: (c_out, c_in) @ (c_in, T) on the MXU, f32 accumulation.

    x_ref: (c_in,  T)   VMEM   (T = spatial tile, multiple of 128 lanes)
    w_ref: (c_out, c_in) VMEM
    b_ref: (c_out, 1)    VMEM  (broadcast along lanes)
    o_ref: (c_out, T)    VMEM
    """
    acc = jax.lax.dot_general(
        w_ref[...], x_ref[...],
        dimension_numbers=(((1,), (0,)), ((), ())),
        preferred_element_type=jnp.float32)            # (c_out, T)
    o_ref[...] = (acc + b_ref[...]).astype(o_ref.dtype)


# ------------------------------ block selection -------------------------------
def _pick_rows_per_block(rows, c_in, c_out, itemsize):
    """How many 128-lane spatial rows go into one block.

    MiB-scale blocks (amortize ~0.35us/step pipeline overhead) while keeping the
    double-buffered (x + out) blocks around ~6 MiB -> comfortably under every
    chip's default scoped VMEM limit (16 MiB v5e, 32 MiB v6e/v7x), leaving room
    for Mosaic internal scratch.  Ragged last blocks are handled by Pallas
    masking, so no divisor requirement.
    """
    lanes = 128
    budget_bytes = 6 * 1024 * 1024
    bytes_per_row = 2 * (c_in + c_out) * lanes * itemsize   # x2: double buffering
    cap = max(8, budget_bytes // max(bytes_per_row, 1))
    # v7x: when one image is > ~1 MiB, ensure >= ~4 spatial steps per image so the
    # DMA-in / compute / DMA-out pipeline overlaps and both TensorCores get work.
    per_image_bytes = (c_in + c_out) * rows * lanes * itemsize
    if per_image_bytes > (1 << 20):
        cap = min(cap, max(8, pl.cdiv(rows, 4)))
    if rows <= cap:
        return rows                      # whole image in one block (== full dim: legal)
    return max(8, cap - cap % 8)         # multiple of 8 sublanes; cdiv grid masks the tail
    # TODO(synk): extremely large c_in+c_out (thousands) would also need channel
    # tiling to stay inside VMEM; out of scope for `align`'s channel counts.


# --------------------------------- wrapper ------------------------------------
def conv1x1_pallas(x_nchw, weight, bias, *, block_rows=None):
    """1x1 Conv2d: x (N, C_in, H, W), weight (C_out, C_in, 1, 1), bias (C_out,)."""
    n, c_in, h, w = x_nchw.shape
    c_out = weight.shape[0]
    hw = h * w
    dtype = x_nchw.dtype
    itemsize = jnp.dtype(dtype).itemsize

    # Flatten spatial dim; pad (one cheap pass, only when needed) up to a multiple
    # of 128 so every tile is (sublane x lane)-dense with unmasked 128-wide stores.
    hw_pad = pl.cdiv(hw, 128) * 128
    x3 = x_nchw.reshape(n, c_in, hw)
    if hw_pad != hw:
        x3 = jnp.pad(x3, ((0, 0), (0, 0), (0, hw_pad - hw)))
    rows = hw_pad // 128

    s = block_rows if block_rows is not None else _pick_rows_per_block(
        rows, c_in, c_out, itemsize)
    n_sblocks = pl.cdiv(rows, s)
    grid = (n, n_sblocks)

    use_mxu = (c_in >= 32) or (c_in * c_out >= 1024)

    if use_mxu:
        # MXU path: 3-D layout (n, c_in, hw_pad), 2-D (c_in, T) tiles.
        tile = s * 128
        w2 = weight.reshape(c_out, c_in).astype(dtype)
        b2 = bias.reshape(c_out, 1).astype(jnp.float32)
        out3 = pl.pallas_call(
            _conv1x1_mxu_kernel,
            out_shape=jax.ShapeDtypeStruct((n, c_out, hw_pad), dtype),
            grid_spec=pltpu.PrefetchScalarGridSpec(
                num_scalar_prefetch=0,
                grid=grid,
                in_specs=[
                    pl.BlockSpec((None, c_in, tile), lambda i, j: (i, 0, j)),
                    # tiny weights/bias: whole-array VMEM blocks, constant index
                    pl.BlockSpec((c_out, c_in), lambda i, j: (0, 0)),
                    pl.BlockSpec((c_out, 1), lambda i, j: (0, 0)),
                ],
                out_specs=pl.BlockSpec((None, c_out, tile), lambda i, j: (i, 0, j)),
            ),
            compiler_params=pltpu.CompilerParams(
                dimension_semantics=("parallel", "parallel")),
        )(x3, w2, b2)
        out = out3
    else:
        # VPU path: 4-D layout (n, c_in, rows, 128), dense (s, 128) per-channel slabs.
        x4 = x3.reshape(n, c_in, rows, 128)
        w2 = weight.reshape(c_out, c_in).astype(jnp.float32)
        b1 = bias.astype(jnp.float32)
        out4 = pl.pallas_call(
            _conv1x1_vpu_kernel,
            out_shape=jax.ShapeDtypeStruct((n, c_out, rows, 128), dtype),
            grid_spec=pltpu.PrefetchScalarGridSpec(
                num_scalar_prefetch=0,
                grid=grid,
                in_specs=[
                    pl.BlockSpec((None, c_in, s, 128), lambda i, j: (i, 0, j, 0)),
                    pl.BlockSpec(memory_space=pltpu.MemorySpace.SMEM),
                    pl.BlockSpec(memory_space=pltpu.MemorySpace.SMEM),
                ],
                out_specs=pl.BlockSpec((None, c_out, s, 128),
                                       lambda i, j: (i, 0, j, 0)),
            ),
            compiler_params=pltpu.CompilerParams(
                dimension_semantics=("parallel", "parallel")),
        )(x4, w2, b1)
        out = out4.reshape(n, c_out, hw_pad)

    if hw_pad != hw:
        out = out[:, :, :hw]
    return out.reshape(n, c_out, h, w)


# ------------------------------ align module ----------------------------------
class Align:
    """JAX port of model/STGMN.py::align."""

    def __init__(self, c_in, c_out, key):
        self.c_in = c_in
        self.c_out = c_out
        self.weight = None
        self.bias = None
        if c_in > c_out:
            kw, kb = jax.random.split(key)
            bound = 1.0 / (c_in ** 0.5)
            self.weight = jax.random.uniform(
                kw, (c_out, c_in, 1, 1), jnp.float32, -bound, bound)
            self.bias = jax.random.uniform(
                kb, (c_out,), jnp.float32, -bound, bound)

    def __call__(self, x):
        if self.c_in > self.c_out:
            return conv1x1_pallas(x, self.weight, self.bias)
        if self.c_in < self.c_out:
            # F.pad(x, [0,0, 0,0, 0, c_out-c_in, 0,0]) == zero-pad channel dim
            # (pure data movement, no kernel needed)
            return jnp.pad(
                x, ((0, 0), (0, self.c_out - self.c_in), (0, 0), (0, 0)))
        return x


# ----------------------------------- main --------------------------------------
if __name__ == "__main__":
    key = jax.random.PRNGKey(0)
    k_x, k_mod, k_x2, k_x3, k_x4, k_x5, k_mod2 = jax.random.split(key, 7)

    def conv_ref(x, weight, bias):
        c_out, c_in = weight.shape[0], weight.shape[1]
        return (jnp.einsum("nchw,oc->nohw", x, weight.reshape(c_out, c_in))
                + bias[None, :, None, None])

    # case 1: c_in > c_out, small channels -> VPU path (HW multiple of 128)
    n, c_in, c_out, h, w = 2, 8, 4, 16, 16
    x = jax.random.normal(k_x, (n, c_in, h, w), jnp.float32)
    mod = Align(c_in, c_out, k_mod)
    y = jax.block_until_ready(mod(x))
    assert y.shape == (n, c_out, h, w)
    assert jnp.allclose(y, conv_ref(x, mod.weight, mod.bias),
                        atol=1e-5, rtol=1e-5), "conv1x1 (VPU) mismatch"

    # case 1b: HW not a multiple of 128 -> padded lane-dense layout
    x_odd = jax.random.normal(k_x3, (n, c_in, 10, 10), jnp.float32)
    y_odd = jax.block_until_ready(mod(x_odd))
    assert jnp.allclose(y_odd, conv_ref(x_odd, mod.weight, mod.bias),
                        atol=1e-5, rtol=1e-5), "conv1x1 (odd HW) mismatch"

    # case 1c: multi-step spatial grid with a ragged (masked) last block
    x_big = jax.random.normal(k_x4, (n, c_in, 48, 48), jnp.float32)  # rows=18, s=8
    y_big = jax.block_until_ready(
        conv1x1_pallas(x_big, mod.weight, mod.bias, block_rows=8))
    assert jnp.allclose(y_big, conv_ref(x_big, mod.weight, mod.bias),
                        atol=1e-5, rtol=1e-5), "conv1x1 (ragged grid) mismatch"

    # case 1d: larger channel counts -> MXU path
    x_mxu = jax.random.normal(k_x5, (n, 64, 16, 16), jnp.float32)
    mod_mxu = Align(64, 32, k_mod2)
    y_mxu = jax.block_until_ready(mod_mxu(x_mxu))
    assert y_mxu.shape == (n, 32, 16, 16)
    assert jnp.allclose(y_mxu, conv_ref(x_mxu, mod_mxu.weight, mod_mxu.bias),
                        atol=2e-2, rtol=2e-2), "conv1x1 (MXU) mismatch"

    # case 2: c_in < c_out -> channel zero-pad
    x2 = jax.random.normal(k_x2, (n, 4, h, w), jnp.float32)
    mod2 = Align(4, 8, k_mod)
    y2 = jax.block_until_ready(mod2(x2))
    assert y2.shape == (n, 8, h, w)
    assert jnp.allclose(y2[:, :4], x2) and jnp.all(y2[:, 4:] == 0)

    # case 3: identity
    mod3 = Align(4, 4, k_mod)
    y3 = jax.block_until_ready(mod3(x2))
    assert jnp.allclose(y3, x2)

    print("KERNEL_OK")
</pallas_src>

<mosaic_0001>
module attributes {stable_mosaic.version = 11 : i64} {
  func.func @_conv1x1_vpu_kernel(%arg0: i32, %arg1: i32, %arg2: memref<1x8x2x128xf32, #tpu.memory_space<vmem>>, %arg3: memref<4x8xf32, #tpu.memory_space<smem>>, %arg4: memref<4xf32, #tpu.memory_space<smem>>, %arg5: memref<1x4x2x128xf32, #tpu.memory_space<vmem>>) attributes {dimension_semantics = [#tpu.dimension_semantics<parallel>, #tpu.dimension_semantics<parallel>], iteration_bounds = array<i64: 2, 1>, scalar_prefetch = 0 : i64, scratch_operands = 0 : i64, tpu.core_type = #tpu.core_type<tc>, window_params = [{transform_indices = @transform_0, window_bounds = array<i64: 1, 8, 2, 128>}, {transform_indices = @transform_1, window_bounds = array<i64: 4, 8>}, {transform_indices = @transform_2, window_bounds = array<i64: 4>}, {transform_indices = @transform_3, window_bounds = array<i64: 1, 4, 2, 128>}]} {
    %c0 = arith.constant 0 : index
    %c0_0 = arith.constant 0 : index
    %c0_1 = arith.constant 0 : index
    %c0_2 = arith.constant 0 : index
    %0 = vector.load %arg2[%c0, %c0_0, %c0_1, %c0_2] : memref<1x8x2x128xf32, #tpu.memory_space<vmem>>, vector<1x1x2x128xf32>
    %1 = vector.shape_cast %0 : vector<1x1x2x128xf32> to vector<2x128xf32>
    %c0_3 = arith.constant 0 : index
    %c0_4 = arith.constant 0 : index
    %2 = memref.load %arg3[%c0_3, %c0_4] : memref<4x8xf32, #tpu.memory_space<smem>>
    %3 = vector.broadcast %2 : f32 to vector<2x128xf32>
    %4 = arith.mulf %1, %3 : vector<2x128xf32>
    %c0_5 = arith.constant 0 : index
    %5 = memref.load %arg4[%c0_5] : memref<4xf32, #tpu.memory_space<smem>>
    %6 = vector.broadcast %5 : f32 to vector<2x128xf32>
    %7 = arith.addf %4, %6 : vector<2x128xf32>
    %c1 = arith.constant 1 : index
    %c0_6 = arith.constant 0 : index
    %8 = memref.load %arg3[%c1, %c0_6] : memref<4x8xf32, #tpu.memory_space<smem>>
    %9 = vector.broadcast %8 : f32 to vector<2x128xf32>
    %10 = arith.mulf %1, %9 : vector<2x128xf32>
    %c1_7 = arith.constant 1 : index
    %11 = memref.load %arg4[%c1_7] : memref<4xf32, #tpu.memory_space<smem>>
    %12 = vector.broadcast %11 : f32 to vector<2x128xf32>
    %13 = arith.addf %10, %12 : vector<2x128xf32>
    %c2 = arith.constant 2 : index
    %c0_8 = arith.constant 0 : index
    %14 = memref.load %arg3[%c2, %c0_8] : memref<4x8xf32, #tpu.memory_space<smem>>
    %15 = vector.broadcast %14 : f32 to vector<2x128xf32>
    %16 = arith.mulf %1, %15 : vector<2x128xf32>
    %c2_9 = arith.constant 2 : index
    %17 = memref.load %arg4[%c2_9] : memref<4xf32, #tpu.memory_space<smem>>
    %18 = vector.broadcast %17 : f32 to vector<2x128xf32>
    %19 = arith.addf %16, %18 : vector<2x128xf32>
    %c3 = arith.constant 3 : index
    %c0_10 = arith.constant 0 : index
    %20 = memref.load %arg3[%c3, %c0_10] : memref<4x8xf32, #tpu.memory_space<smem>>
    %21 = vector.broadcast %20 : f32 to vector<2x128xf32>
    %22 = arith.mulf %1, %21 : vector<2x128xf32>
    %c3_11 = arith.constant 3 : index
    %23 = memref.load %arg4[%c3_11] : memref<4xf32, #tpu.memory_space<smem>>
    %24 = vector.broadcast %23 : f32 to vector<2x128xf32>
    %25 = arith.addf %22, %24 : vector<2x128xf32>
    %c0_12 = arith.constant 0 : index
    %c1_13 = arith.constant 1 : index
    %c0_14 = arith.constant 0 : index
    %c0_15 = arith.constant 0 : index
    %26 = vector.load %arg2[%c0_12, %c1_13, %c0_14, %c0_15] : memref<1x8x2x128xf32, #tpu.memory_space<vmem>>, vector<1x1x2x128xf32>
    %27 = vector.shape_cast %26 : vector<1x1x2x128xf32> to vector<2x128xf32>
    %c0_16 = arith.constant 0 : index
    %c1_17 = arith.constant 1 : index
    %28 = memref.load %arg3[%c0_16, %c1_17] : memref<4x8xf32, #tpu.memory_space<smem>>
    %29 = vector.broadcast %28 : f32 to vector<2x128xf32>
    %30 = arith.mulf %27, %29 : vector<2x128xf32>
    %31 = arith.addf %7, %30 : vector<2x128xf32>
    %c1_18 = arith.constant 1 : index
    %c1_19 = arith.constant 1 : index
    %32 = memref.load %arg3[%c1_18, %c1_19] : memref<4x8xf32, #tpu.memory_space<smem>>
    %33 = vector.broadcast %32 : f32 to vector<2x128xf32>
    %34 = arith.mulf %27, %33 : vector<2x128xf32>
    %35 = arith.addf %13, %34 : vector<2x128xf32>
    %c2_20 = arith.constant 2 : index
    %c1_21 = arith.constant 1 : index
    %36 = memref.load %arg3[%c2_20, %c1_21] : memref<4x8xf32, #tpu.memory_space<smem>>
    %37 = vector.broadcast %36 : f32 to vector<2x128xf32>
    %38 = arith.mulf %27, %37 : vector<2x128xf32>
    %39 = arith.addf %19, %38 : vector<2x128xf32>
    %c3_22 = arith.constant 3 : index
    %c1_23 = arith.constant 1 : index
    %40 = memref.load %arg3[%c3_22, %c1_23] : memref<4x8xf32, #tpu.memory_space<smem>>
    %41 = vector.broadcast %40 : f32 to vector<2x128xf32>
    %42 = arith.mulf %27, %41 : vector<2x128xf32>
    %43 = arith.addf %25, %42 : vector<2x128xf32>
    %c0_24 = arith.constant 0 : index
    %c2_25 = arith.constant 2 : index
    %c0_26 = arith.constant 0 : index
    %c0_27 = arith.constant 0 : index
    %44 = vector.load %arg2[%c0_24, %c2_25, %c0_26, %c0_27] : memref<1x8x2x128xf32, #tpu.memory_space<vmem>>, vector<1x1x2x128xf32>
    %45 = vector.shape_cast %44 : vector<1x1x2x128xf32> to vector<2x128xf32>
    %c0_28 = arith.constant 0 : index
    %c2_29 = arith.constant 2 : index
    %46 = memref.load %arg3[%c0_28, %c2_29] : memref<4x8xf32, #tpu.memory_space<smem>>
    %47 = vector.broadcast %46 : f32 to vector<2x128xf32>
    %48 = arith.mulf %45, %47 : vector<2x128xf32>
    %49 = arith.addf %31, %48 : vector<2x128xf32>
    %c1_30 = arith.constant 1 : index
    %c2_31 = arith.constant 2 : index
    %50 = memref.load %arg3[%c1_30, %c2_31] : memref<4x8xf32, #tpu.memory_space<smem>>
    %51 = vector.broadcast %50 : f32 to vector<2x128xf32>
    %52 = arith.mulf %45, %51 : vector<2x128xf32>
    %53 = arith.addf %35, %52 : vector<2x128xf32>
    %c2_32 = arith.constant 2 : index
    %c2_33 = arith.constant 2 : index
    %54 = memref.load %arg3[%c2_32, %c2_33] : memref<4x8xf32, #tpu.memory_space<smem>>
    %55 = vector.broadcast %54 : f32 to vector<2x128xf32>
    %56 = arith.mulf %45, %55 : vector<2x128xf32>
    %57 = arith.addf %39, %56 : vector<2x128xf32>
    %c3_34 = arith.constant 3 : index
    %c2_35 = arith.constant 2 : index
    %58 = memref.load %arg3[%c3_34, %c2_35] : memref<4x8xf32, #tpu.memory_space<smem>>
    %59 = vector.broadcast %58 : f32 to vector<2x128xf32>
    %60 = arith.mulf %45, %59 : vector<2x128xf32>
    %61 = arith.addf %43, %60 : vector<2x128xf32>
    %c0_36 = arith.constant 0 : index
    %c3_37 = arith.constant 3 : index
    %c0_38 = arith.constant 0 : index
    %c0_39 = arith.constant 0 : index
    %62 = vector.load %arg2[%c0_36, %c3_37, %c0_38, %c0_39] : memref<1x8x2x128xf32, #tpu.memory_space<vmem>>, vector<1x1x2x128xf32>
    %63 = vector.shape_cast %62 : vector<1x1x2x128xf32> to vector<2x128xf32>
    %c0_40 = arith.constant 0 : index
    %c3_41 = arith.constant 3 : index
    %64 = memref.load %arg3[%c0_40, %c3_41] : memref<4x8xf32, #tpu.memory_space<smem>>
    %65 = vector.broadcast %64 : f32 to vector<2x128xf32>
    %66 = arith.mulf %63, %65 : vector<2x128xf32>
    %67 = arith.addf %49, %66 : vector<2x128xf32>
    %c1_42 = arith.constant 1 : index
    %c3_43 = arith.constant 3 : index
    %68 = memref.load %arg3[%c1_42, %c3_43] : memref<4x8xf32, #tpu.memory_space<smem>>
    %69 = vector.broadcast %68 : f32 to vector<2x128xf32>
    %70 = arith.mulf %63, %69 : vector<2x128xf32>
    %71 = arith.addf %53, %70 : vector<2x128xf32>
    %c2_44 = arith.constant 2 : index
    %c3_45 = arith.constant 3 : index
    %72 = memref.load %arg3[%c2_44, %c3_45] : memref<4x8xf32, #tpu.memory_space<smem>>
    %73 = vector.broadcast %72 : f32 to vector<2x128xf32>
    %74 = arith.mulf %63, %73 : vector<2x128xf32>
    %75 = arith.addf %57, %74 : vector<2x128xf32>
    %c3_46 = arith.constant 3 : index
    %c3_47 = arith.constant 3 : index
    %76 = memref.load %arg3[%c3_46, %c3_47] : memref<4x8xf32, #tpu.memory_space<smem>>
    %77 = vector.broadcast %76 : f32 to vector<2x128xf32>
    %78 = arith.mulf %63, %77 : vector<2x128xf32>
    %79 = arith.addf %61, %78 : vector<2x128xf32>
    %c0_48 = arith.constant 0 : index
    %c4 = arith.constant 4 : index
    %c0_49 = arith.constant 0 : index
    %c0_50 = arith.constant 0 : index
    %80 = vector.load %arg2[%c0_48, %c4, %c0_49, %c0_50] : memref<1x8x2x128xf32, #tpu.memory_space<vmem>>, vector<1x1x2x128xf32>
    %81 = vector.shape_cast %80 : vector<1x1x2x128xf32> to vector<2x128xf32>
    %c0_51 = arith.constant 0 : index
    %c4_52 = arith.constant 4 : index
    %82 = memref.load %arg3[%c0_51, %c4_52] : memref<4x8xf32, #tpu.memory_space<smem>>
    %83 = vector.broadcast %82 : f32 to vector<2x128xf32>
    %84 = arith.mulf %81, %83 : vector<2x128xf32>
    %85 = arith.addf %67, %84 : vector<2x128xf32>
    %c1_53 = arith.constant 1 : index
    %c4_54 = arith.constant 4 : index
    %86 = memref.load %arg3[%c1_53, %c4_54] : memref<4x8xf32, #tpu.memory_space<smem>>
    %87 = vector.broadcast %86 : f32 to vector<2x128xf32>
    %88 = arith.mulf %81, %87 : vector<2x128xf32>
    %89 = arith.addf %71, %88 : vector<2x128xf32>
    %c2_55 = arith.constant 2 : index
    %c4_56 = arith.constant 4 : index
    %90 = memref.load %arg3[%c2_55, %c4_56] : memref<4x8xf32, #tpu.memory_space<smem>>
    %91 = vector.broadcast %90 : f32 to vector<2x128xf32>
    %92 = arith.mulf %81, %91 : vector<2x128xf32>
    %93 = arith.addf %75, %92 : vector<2x128xf32>
    %c3_57 = arith.constant 3 : index
    %c4_58 = arith.constant 4 : index
    %94 = memref.load %arg3[%c3_57, %c4_58] : memref<4x8xf32, #tpu.memory_space<smem>>
    %95 = vector.broadcast %94 : f32 to vector<2x128xf32>
    %96 = arith.mulf %81, %95 : vector<2x128xf32>
    %97 = arith.addf %79, %96 : vector<2x128xf32>
    %c0_59 = arith.constant 0 : index
    %c5 = arith.constant 5 : index
    %c0_60 = arith.constant 0 : index
    %c0_61 = arith.constant 0 : index
    %98 = vector.load %arg2[%c0_59, %c5, %c0_60, %c0_61] : memref<1x8x2x128xf32, #tpu.memory_space<vmem>>, vector<1x1x2x128xf32>
    %99 = vector.shape_cast %98 : vector<1x1x2x128xf32> to vector<2x128xf32>
    %c0_62 = arith.constant 0 : index
    %c5_63 = arith.constant 5 : index
    %100 = memref.load %arg3[%c0_62, %c5_63] : memref<4x8xf32, #tpu.memory_space<smem>>
    %101 = vector.broadcast %100 : f32 to vector<2x128xf32>
    %102 = arith.mulf %99, %101 : vector<2x128xf32>
    %103 = arith.addf %85, %102 : vector<2x128xf32>
    %c1_64 = arith.constant 1 : index
    %c5_65 = arith.constant 5 : index
    %104 = memref.load %arg3[%c1_64, %c5_65] : memref<4x8xf32, #tpu.memory_space<smem>>
    %105 = vector.broadcast %104 : f32 to vector<2x128xf32>
    %106 = arith.mulf %99, %105 : vector<2x128xf32>
    %107 = arith.addf %89, %106 : vector<2x128xf32>
    %c2_66 = arith.constant 2 : index
    %c5_67 = arith.constant 5 : index
    %108 = memref.load %arg3[%c2_66, %c5_67] : memref<4x8xf32, #tpu.memory_space<smem>>
    %109 = vector.broadcast %108 : f32 to vector<2x128xf32>
    %110 = arith.mulf %99, %109 : vector<2x128xf32>
    %111 = arith.addf %93, %110 : vector<2x128xf32>
    %c3_68 = arith.constant 3 : index
    %c5_69 = arith.constant 5 : index
    %112 = memref.load %arg3[%c3_68, %c5_69] : memref<4x8xf32, #tpu.memory_space<smem>>
    %113 = vector.broadcast %112 : f32 to vector<2x128xf32>
    %114 = arith.mulf %99, %113 : vector<2x128xf32>
    %115 = arith.addf %97, %114 : vector<2x128xf32>
    %c0_70 = arith.constant 0 : index
    %c6 = arith.constant 6 : index
    %c0_71 = arith.constant 0 : index
    %c0_72 = arith.constant 0 : index
    %116 = vector.load %arg2[%c0_70, %c6, %c0_71, %c0_72] : memref<1x8x2x128xf32, #tpu.memory_space<vmem>>, vector<1x1x2x128xf32>
    %117 = vector.shape_cast %116 : vector<1x1x2x128xf32> to vector<2x128xf32>
    %c0_73 = arith.constant 0 : index
    %c6_74 = arith.constant 6 : index
    %118 = memref.load %arg3[%c0_73, %c6_74] : memref<4x8xf32, #tpu.memory_space<smem>>
    %119 = vector.broadcast %118 : f32 to vector<2x128xf32>
    %120 = arith.mulf %117, %119 : vector<2x128xf32>
    %121 = arith.addf %103, %120 : vector<2x128xf32>
    %c1_75 = arith.constant 1 : index
    %c6_76 = arith.constant 6 : index
    %122 = memref.load %arg3[%c1_75, %c6_76] : memref<4x8xf32, #tpu.memory_space<smem>>
    %123 = vector.broadcast %122 : f32 to vector<2x128xf32>
    %124 = arith.mulf %117, %123 : vector<2x128xf32>
    %125 = arith.addf %107, %124 : vector<2x128xf32>
    %c2_77 = arith.constant 2 : index
    %c6_78 = arith.constant 6 : index
    %126 = memref.load %arg3[%c2_77, %c6_78] : memref<4x8xf32, #tpu.memory_space<smem>>
    %127 = vector.broadcast %126 : f32 to vector<2x128xf32>
    %128 = arith.mulf %117, %127 : vector<2x128xf32>
    %129 = arith.addf %111, %128 : vector<2x128xf32>
    %c3_79 = arith.constant 3 : index
    %c6_80 = arith.constant 6 : index
    %130 = memref.load %arg3[%c3_79, %c6_80] : memref<4x8xf32, #tpu.memory_space<smem>>
    %131 = vector.broadcast %130 : f32 to vector<2x128xf32>
    %132 = arith.mulf %117, %131 : vector<2x128xf32>
    %133 = arith.addf %115, %132 : vector<2x128xf32>
    %c0_81 = arith.constant 0 : index
    %c7 = arith.constant 7 : index
    %c0_82 = arith.constant 0 : index
    %c0_83 = arith.constant 0 : index
    %134 = vector.load %arg2[%c0_81, %c7, %c0_82, %c0_83] : memref<1x8x2x128xf32, #tpu.memory_space<vmem>>, vector<1x1x2x128xf32>
    %135 = vector.shape_cast %134 : vector<1x1x2x128xf32> to vector<2x128xf32>
    %c0_84 = arith.constant 0 : index
    %c7_85 = arith.constant 7 : index
    %136 = memref.load %arg3[%c0_84, %c7_85] : memref<4x8xf32, #tpu.memory_space<smem>>
    %137 = vector.broadcast %136 : f32 to vector<2x128xf32>
    %138 = arith.mulf %135, %137 : vector<2x128xf32>
    %139 = arith.addf %121, %138 : vector<2x128xf32>
    %c1_86 = arith.constant 1 : index
    %c7_87 = arith.constant 7 : index
    %140 = memref.load %arg3[%c1_86, %c7_87] : memref<4x8xf32, #tpu.memory_space<smem>>
    %141 = vector.broadcast %140 : f32 to vector<2x128xf32>
    %142 = arith.mulf %135, %141 : vector<2x128xf32>
    %143 = arith.addf %125, %142 : vector<2x128xf32>
    %c2_88 = arith.constant 2 : index
    %c7_89 = arith.constant 7 : index
    %144 = memref.load %arg3[%c2_88, %c7_89] : memref<4x8xf32, #tpu.memory_space<smem>>
    %145 = vector.broadcast %144 : f32 to vector<2x128xf32>
    %146 = arith.mulf %135, %145 : vector<2x128xf32>
    %147 = arith.addf %129, %146 : vector<2x128xf32>
    %c3_90 = arith.constant 3 : index
    %c7_91 = arith.constant 7 : index
    %148 = memref.load %arg3[%c3_90, %c7_91] : memref<4x8xf32, #tpu.memory_space<smem>>
    %149 = vector.broadcast %148 : f32 to vector<2x128xf32>
    %150 = arith.mulf %135, %149 : vector<2x128xf32>
    %151 = arith.addf %133, %150 : vector<2x128xf32>
    %c0_92 = arith.constant 0 : index
    %c0_93 = arith.constant 0 : index
    %c0_94 = arith.constant 0 : index
    %c0_95 = arith.constant 0 : index
    %152 = vector.load %arg5[%c0_92, %c0_93, %c0_94, %c0_95] : memref<1x4x2x128xf32, #tpu.memory_space<vmem>>, vector<1x1x2x128xf32>
    %153 = vector.shape_cast %152 : vector<1x1x2x128xf32> to vector<2x128xf32>
    %154 = vector.shape_cast %139 : vector<2x128xf32> to vector<1x1x2x128xf32>
    tpu.vector_store %arg5[%c0_92, %c0_93, %c0_94, %c0_95], %154 {strides = array<i32>} : memref<1x4x2x128xf32, #tpu.memory_space<vmem>>, vector<1x1x2x128xf32>,
    %c0_96 = arith.constant 0 : index
    %c1_97 = arith.constant 1 : index
    %c0_98 = arith.constant 0 : index
    %c0_99 = arith.constant 0 : index
    %155 = vector.load %arg5[%c0_96, %c1_97, %c0_98, %c0_99] : memref<1x4x2x128xf32, #tpu.memory_space<vmem>>, vector<1x1x2x128xf32>
    %156 = vector.shape_cast %155 : vector<1x1x2x128xf32> to vector<2x128xf32>
    %157 = vector.shape_cast %143 : vector<2x128xf32> to vector<1x1x2x128xf32>
    tpu.vector_store %arg5[%c0_96, %c1_97, %c0_98, %c0_99], %157 {strides = array<i32>} : memref<1x4x2x128xf32, #tpu.memory_space<vmem>>, vector<1x1x2x128xf32>,
    %c0_100 = arith.constant 0 : index
    %c2_101 = arith.constant 2 : index
    %c0_102 = arith.constant 0 : index
    %c0_103 = arith.constant 0 : index
    %158 = vector.load %arg5[%c0_100, %c2_101, %c0_102, %c0_103] : memref<1x4x2x128xf32, #tpu.memory_space<vmem>>, vector<1x1x2x128xf32>
    %159 = vector.shape_cast %158 : vector<1x1x2x128xf32> to vector<2x128xf32>
    %160 = vector.shape_cast %147 : vector<2x128xf32> to vector<1x1x2x128xf32>
    tpu.vector_store %arg5[%c0_100, %c2_101, %c0_102, %c0_103], %160 {strides = array<i32>} : memref<1x4x2x128xf32, #tpu.memory_space<vmem>>, vector<1x1x2x128xf32>,
    %c0_104 = arith.constant 0 : index
    %c3_105 = arith.constant 3 : index
    %c0_106 = arith.constant 0 : index
    %c0_107 = arith.constant 0 : index
    %161 = vector.load %arg5[%c0_104, %c3_105, %c0_106, %c0_107] : memref<1x4x2x128xf32, #tpu.memory_space<vmem>>, vector<1x1x2x128xf32>
    %162 = vector.shape_cast %161 : vector<1x1x2x128xf32> to vector<2x128xf32>
    %163 = vector.shape_cast %151 : vector<2x128xf32> to vector<1x1x2x128xf32>
    tpu.vector_store %arg5[%c0_104, %c3_105, %c0_106, %c0_107], %163 {strides = array<i32>} : memref<1x4x2x128xf32, #tpu.memory_space<vmem>>, vector<1x1x2x128xf32>,
    return
  }
  func.func @transform_0(%arg0: i32, %arg1: i32) -> (i32, i32, i32, i32) {
    %c0_i32 = arith.constant 0 : i32
    %c0_i32_0 = arith.constant 0 : i32
    %c0_i32_1 = arith.constant 0 : i32
    return %arg0, %c0_i32, %arg1, %c0_i32_0 : i32, i32, i32, i32
  }
  func.func @transform_1(%arg0: i32, %arg1: i32) -> (i32, i32) {
    %c0_i32 = arith.constant 0 : i32
    %c0_i32_0 = arith.constant 0 : i32
    %c0_i32_1 = arith.constant 0 : i32
    return %c0_i32, %c0_i32_0 : i32, i32
  }
  func.func @transform_2(%arg0: i32, %arg1: i32) -> i32 {
    %c0_i32 = arith.constant 0 : i32
    %c0_i32_0 = arith.constant 0 : i32
    return %c0_i32 : i32
  }
  func.func @transform_3(%arg0: i32, %arg1: i32) -> (i32, i32, i32, i32) {
    %c0_i32 = arith.constant 0 : i32
    %c0_i32_0 = arith.constant 0 : i32
    %c0_i32_1 = arith.constant 0 : i32
    return %arg0, %c0_i32, %arg1, %c0_i32_0 : i32, i32, i32, i32
  }
}

</mosaic_0001>

<llo_original>
// kernel: tpu_custom_call.1
$region0: #{tpu_custom_call.1}
  #allocation0 [shape = 'u32[]', space=smem, size = 0x4, offset = 0x4, fixed_abs, tag = 'smem constant byte address 0x4 - core index']
  #allocation1 [shape = 'u32[144,128]{1,0:T(1,128)}', space=vmem, size = 0x12000, scoped, tag = 'internal scratch']
  %s0 = inlined_call_operand.hbm [shape: f32[2,8,2,128], index: 0, kind: input, shape index: {}]
  %s1 = inlined_call_operand.hbm [shape: f32[4,8], index: 1, kind: input, shape index: {}]
  %s2 = inlined_call_operand.vmem [shape: f32[4], index: 2, kind: input, shape index: {}]
  %s3 = inlined_call_operand.hbm [shape: f32[2,4,2,128], index: 3, kind: output, shape index: {}]
  %s4 = sld [smem:[#allocation0]]
  $region57: #{tpu_custom_call.1} parent=0
    _
  %s6 = ssub.s32 1, %s4
  %s7 = scalar_select 0, %s6, %s4
  $region1: #{tpu_custom_call.1} parent=0
    #allocation2 [shape = 'u8[16384]{0}', space=vmem, size = 0x4000, scoped, tag = 'input window, operand 0']
    #allocation3 [shape = 's32[2]{0}', space=sflag, size = 0x8, scoped, tag = 'scoped memory for tpu_custom_call.1']
    #allocation4 [shape = 's32[2]{0}', space=sflag, size = 0x8, scoped, tag = 'scoped memory for tpu_custom_call.1']
    #allocation5 [shape = 's32[2]{0}', space=sflag, size = 0x8, scoped, tag = 'scoped memory for tpu_custom_call.1']
    #allocation6 [shape = 's32[2]{0}', space=sflag, size = 0x8, scoped, tag = 'scoped memory for tpu_custom_call.1']
    #allocation7 [shape = 'u8[2048]{0}', space=smem, size = 0x800, scoped, tag = 'input window, operand 1, single buffered']
    #allocation8 [shape = 'u8[512]{0}', space=smem, size = 0x200, scoped, tag = 'input window, operand 2, single buffered']
    #allocation9 [shape = 'u8[8192]{0}', space=vmem, size = 0x2000, scoped, tag = 'output window, operand 0']
    %8 = vsyncpa [#allocation3], 0
    %s9 = scalar_lea.sflag [#allocation3], 1
    %10 = vsyncpa %s9, 0
    %11 = vsyncpa [#allocation5], 0
    %12 = vsyncpa [#allocation6], 0
    %13 = vsyncpa [#allocation4], 0
    %s14 = scalar_lea.sflag [#allocation4], 1
    %15 = vsyncpa %s14, 0
    loop: start=0, step=1, limit=4
    $region2: #{tpu_custom_call.1} parent=1 // loop_pre_header
      _
    $region3: #{tpu_custom_call.1} parent=1 // loop_header
      %s17 = sphi 0, %s21
      %p18 = scmp.ge.s32.totalorder %s17, 4
      %s24 = sphi 0, %s36
      %s25 = sphi 0, %s32
      %s26 = sphi 0, %s24
      %s27 = sphi 0, %s25
      %s28 = sphi 0, %s26
      %s29 = sphi 0, %s27
      %s41 = sphi 0, %s43
      %s44 = sphi 0, %s41
      %s45 = sphi 0, %s44
      %s61 = sphi 0, %s45
      %s65 = sphi 0, %s65
      %s67 = sphi 0, %s65
      %s68 = sphi 0, %s67
      %s82 = sphi 0, %s68
      %s86 = sphi 0, %s86
      %s88 = sphi 0, %s86
      %s89 = sphi 0, %s88
      %s103 = sphi 0, %s89
      %s111 = sphi 0, %s113
      %s114 = sphi 0, %s111
      %s115 = sphi 0, %s114
      %s131 = sphi 0, %s115
    $region4: #{tpu_custom_call.1} parent=1 // loop_header_branch
      %20 = sbr.rel (%p18) target = $region8
    $region5: #{tpu_custom_call.1} parent=1 // loop_body
      %s22 = ssub.s32 %s17, 1
      %s23 = ssub.s32 %s17, 2
      %s30 = sadd.s32 1, %s25
      %p31 = scmp.ge.s32.totalorder %s30, 1
      %s32 = scalar_select %p31, 0, %s30
      %s33 = sadd.s32 1, %s24
      %s34 = scalar_select %p31, %s33, %s24
      %p35 = scmp.ge.s32.totalorder %s34, 2
      %s36 = scalar_select %p35, 0, %s34
      %s37 = ssub.s32 %s24, %s36
      %s38 = ssub.s32 %s25, %s32
      %s39 = sor.u32 %s37, %s38
      %p40 = scmp.eq.s32.totalorder %s39, 0
      %s42 = sadd.s32 %s41, 1
      %s43 = scalar_select %p40, %s41, %s42
      %p46 = pneg %p40
      %p47 = scmp.eq.s32.totalorder %s17, 1
      %p48 = por %p46, %p47
      %p49 = scmp.ne.s32.totalorder %s41, %s44
      %p50 = scmp.eq.s32.totalorder %s17, 0
      %p51 = por %p49, %p50
      %p52 = scmp.ne.s32.totalorder %s41, %s44
      %p53 = scmp.eq.s32.totalorder %s22, 1
      %p54 = por %p52, %p53
      %p55 = scmp.ne.s32.totalorder %s44, %s45
      %p56 = scmp.eq.s32.totalorder %s22, 0
      %p57 = por %p55, %p56
      %p58 = scmp.ne.s32.totalorder %s44, %s45
      %p59 = scmp.eq.s32.totalorder %s23, 1
      %p60 = por %p58, %p59
      %p62 = scmp.ne.s32.totalorder %s45, %s61
      %p63 = scmp.eq.s32.totalorder %s23, 0
      %p64 = por %p62, %p63
      %s66 = sadd.s32 %s65, 1
      %p69 = scmp.eq.s32.totalorder %s17, 1
      %p70 = scmp.ne.s32.totalorder %s65, %s67
      %p71 = scmp.eq.s32.totalorder %s17, 0
      %p72 = por %p70, %p71
      %p73 = scmp.ne.s32.totalorder %s65, %s67
      %p74 = scmp.eq.s32.totalorder %s22, 1
      %p75 = por %p73, %p74
      %p76 = scmp.ne.s32.totalorder %s67, %s68
      %p77 = scmp.eq.s32.totalorder %s22, 0
      %p78 = por %p76, %p77
      %p79 = scmp.ne.s32.totalorder %s67, %s68
      %p80 = scmp.eq.s32.totalorder %s23, 1
      %p81 = por %p79, %p80
      %p83 = scmp.ne.s32.totalorder %s68, %s82
      %p84 = scmp.eq.s32.totalorder %s23, 0
      %p85 = por %p83, %p84
      %s87 = sadd.s32 %s86, 1
      %p90 = scmp.eq.s32.totalorder %s17, 1
      %p91 = scmp.ne.s32.totalorder %s86, %s88
      %p92 = scmp.eq.s32.totalorder %s17, 0
      %p93 = por %p91, %p92
      %p94 = scmp.ne.s32.totalorder %s86, %s88
      %p95 = scmp.eq.s32.totalorder %s22, 1
      %p96 = por %p94, %p95
      %p97 = scmp.ne.s32.totalorder %s88, %s89
      %p98 = scmp.eq.s32.totalorder %s22, 0
      %p99 = por %p97, %p98
      %p100 = scmp.ne.s32.totalorder %s88, %s89
      %p101 = scmp.eq.s32.totalorder %s23, 1
      %p102 = por %p100, %p101
      %p104 = scmp.ne.s32.totalorder %s89, %s103
      %p105 = scmp.eq.s32.totalorder %s23, 0
      %p106 = por %p104, %p105
      %s107 = ssub.s32 %s24, %s36
      %s108 = ssub.s32 %s25, %s32
      %s109 = sor.u32 %s107, %s108
      %p110 = scmp.eq.s32.totalorder %s109, 0
      %s112 = sadd.s32 %s111, 1
      %s113 = scalar_select %p110, %s111, %s112
      %p116 = pneg %p110
      %p117 = scmp.eq.s32.totalorder %s17, 1
      %p118 = por %p116, %p117
      %p119 = scmp.ne.s32.totalorder %s111, %s114
      %p120 = scmp.eq.s32.totalorder %s17, 0
      %p121 = por %p119, %p120
      %p122 = scmp.ne.s32.totalorder %s111, %s114
      %p123 = scmp.eq.s32.totalorder %s22, 1
      %p124 = por %p122, %p123
      %p125 = scmp.ne.s32.totalorder %s114, %s115
      %p126 = scmp.eq.s32.totalorder %s22, 0
      %p127 = por %p125, %p126
      %p128 = scmp.ne.s32.totalorder %s114, %s115
      %p129 = scmp.eq.s32.totalorder %s23, 1
      %p130 = por %p128, %p129
      %p132 = scmp.ne.s32.totalorder %s115, %s131
      %p133 = scmp.eq.s32.totalorder %s23, 0
      %p134 = por %p132, %p133
      %p135 = scmp.le.s32.totalorder 1, %s17
      %p136 = scmp.lt.s32.totalorder %s17, 3
      %p137 = pnand %p135, %p136
      %p138 = pneg %p137
      // Predicated region
      $region9: #{tpu_custom_call.1} parent=5 // pred_check
        _
      $region10: #{tpu_custom_call.1} parent=5 // pred_check_branch
        %140 = sbr.rel (%p137) target = $region12
      $region11: #{tpu_custom_call.1} parent=5 // pred_region
        %s141 = ssub.s32 %s17, 1
        // Predicated region
        $region13: #{tpu_custom_call.1} parent=11 // pred_check
          %p142 = pneg %p78
        $region14: #{tpu_custom_call.1} parent=11 // pred_check_branch
          %144 = sbr.rel (%p142) target = $region16
        $region15: #{tpu_custom_call.1} parent=11 // pred_region
          %s146 = ssub.s32 64, 64
          %147 = vsyncadd [#allocation5], %s146
          %150 = dma.hbm_to_smem %s1, 64, [#allocation7], [#allocation5]
        $region16: #{tpu_custom_call.1} parent=11 // pred_fallthru
          _
        // Predicated region
        $region17: #{tpu_custom_call.1} parent=11 // pred_check
          %p151 = pneg %p99
        $region18: #{tpu_custom_call.1} parent=11 // pred_check_branch
          %153 = sbr.rel (%p151) target = $region20
        $region19: #{tpu_custom_call.1} parent=11 // pred_region
          %s155 = ssub.s32 16, 16
          %156 = vsyncadd [#allocation6], %s155
          %s158 = sshll.u32 %s2, 4
          %s159 = int_to_ptr.vmem [resolvable:$true] %s158
          %161 = dma.vmem_to_smem %s159, 16, [#allocation8], [#allocation6]
        $region20: #{tpu_custom_call.1} parent=11 // pred_fallthru
          _
      $region12: #{tpu_custom_call.1} parent=5 // pred_fallthru
        _
      %p162 = scmp.lt.s32.totalorder %s17, 2
      // Predicated region
      $region21: #{tpu_custom_call.1} parent=5 // pred_check
        %p163 = pneg %p162
      $region22: #{tpu_custom_call.1} parent=5 // pred_check_branch
        %165 = sbr.rel (%p163) target = $region24
      $region23: #{tpu_custom_call.1} parent=5 // pred_region
        // Predicated region
        $region25: #{tpu_custom_call.1} parent=23 // pred_check
          %p166 = pneg %p51
        $region26: #{tpu_custom_call.1} parent=23 // pred_check_branch
          %168 = sbr.rel (%p166) target = $region28
        $region27: #{tpu_custom_call.1} parent=23 // pred_region
          %s169 = sand.u32 %s41, 1
          %s170 = scalar_lea.sflag [#allocation3], %s169
          %s171 = sand.u32 %s41, 1
          %s172 = smul.addr %s171, 16
          %s173 = scalar_lea.vmem [#allocation2], %s172
          %s175 = ssub.s32 256, 256
          %176 = vsyncadd %s170, %s175
          %s177 = smul.addr %s24, 8
          %s178 = sadd.s32 %s25, %s177
          %s179 = smul.addr %s178, 32
          %s180 = scalar_lea.hbm %s0, %s179
          %s181 = sshll.u32 %s173, 4
          %s182 = int_to_ptr.vmem [resolvable:$true] %s181
          %187 = dma.hbm_to_vmem [thread:$0]  %s180, 256, %s182, %s170, 32, 32, 2
        $region28: #{tpu_custom_call.1} parent=23 // pred_fallthru
          _
      $region24: #{tpu_custom_call.1} parent=5 // pred_fallthru
        _
      %p188 = scmp.le.s32.totalorder 1, %s17
      %p189 = scmp.lt.s32.totalorder %s17, 3
      %p190 = pnand %p188, %p189
      %p191 = pneg %p190
      // Predicated region
      $region29: #{tpu_custom_call.1} parent=5 // pred_check
        _
      $region30: #{tpu_custom_call.1} parent=5 // pred_check_branch
        %193 = sbr.rel (%p190) target = $region32
      $region31: #{tpu_custom_call.1} parent=5 // pred_region
        %s194 = ssub.s32 %s17, 1
        %s195 = sand.u32 %s44, 1
        %s196 = scalar_lea.sflag [#allocation3], %s195
        %s197 = sand.u32 %s44, 1
        %s198 = smul.addr %s197, 16
        %s199 = scalar_lea.vmem [#allocation2], %s198
        // Predicated region
        $region33: #{tpu_custom_call.1} parent=31 // pred_check
          %p200 = pneg %p57
        $region34: #{tpu_custom_call.1} parent=31 // pred_check_branch
          %202 = sbr.rel (%p200) target = $region36
        $region35: #{tpu_custom_call.1} parent=31 // pred_region
          %203 = dma.done %s196, 256
        $region36: #{tpu_custom_call.1} parent=31 // pred_fallthru
          _
        // Predicated region
        $region37: #{tpu_custom_call.1} parent=31 // pred_check
          %p204 = pneg %p78
        $region38: #{tpu_custom_call.1} parent=31 // pred_check_branch
          %206 = sbr.rel (%p204) target = $region40
        $region39: #{tpu_custom_call.1} parent=31 // pred_region
          %207 = dma.done [#allocation5], 64
        $region40: #{tpu_custom_call.1} parent=31 // pred_fallthru
          _
        // Predicated region
        $region41: #{tpu_custom_call.1} parent=31 // pred_check
          %p208 = pneg %p99
        $region42: #{tpu_custom_call.1} parent=31 // pred_check_branch
          %210 = sbr.rel (%p208) target = $region44
        $region43: #{tpu_custom_call.1} parent=31 // pred_region
          %211 = dma.done [#allocation6], 16
        $region44: #{tpu_custom_call.1} parent=31 // pred_fallthru
          _
        %212 = sfence
        %s213 = sand.u32 %s44, 1
        %s214 = scalar_lea.sflag [#allocation3], %s213
        %s215 = sand.u32 %s44, 1
        %s216 = smul.addr %s215, 16
        %s217 = scalar_lea.vmem [#allocation2], %s216
        %p218 = pneg %p57
        %p219 = pneg %p54
        %p220 = pneg %p78
        %p221 = pneg %p75
        %p222 = pneg %p99
        %p223 = pneg %p96
        %p224 = pneg %p127
        %p225 = pneg %p124
        %s226 = sand.u32 %s114, 1
        %s227 = scalar_lea.sflag [#allocation4], %s226
        %s228 = sand.u32 %s114, 1
        %s229 = smul.addr %s228, 8
        %s230 = scalar_lea.vmem [#allocation9], %s229
        %v231 = vld [vmem:[%s199] sm:$0x3]
        %s232 = sld [smem:[#allocation7]]
        %v233 = vstv %s232
        %v234 = vmul.f32 %v231, %v233
        %s235 = sld [smem:[#allocation8]]
        %v236 = vstv %s235
        %v237 = vadd.f32 %v234, %v236
        %s238 = sld [smem:[#allocation7 + $0x80]]
        %v239 = vstv %s238
        %v240 = vmul.f32 %v231, %v239
        %s241 = sld [smem:[#allocation8 + $0x1]]
        %v242 = vstv %s241
        %v243 = vadd.f32 %v240, %v242
        %s244 = sld [smem:[#allocation7 + $0x100]]
        %v245 = vstv %s244
        %v246 = vmul.f32 %v231, %v245
        %s247 = sld [smem:[#allocation8 + $0x2]]
        %v248 = vstv %s247
        %v249 = vadd.f32 %v246, %v248
        %s250 = sld [smem:[#allocation7 + $0x180]]
        %v251 = vstv %s250
        %v252 = vmul.f32 %v231, %v251
        %s253 = sld [smem:[#allocation8 + $0x3]]
        %v254 = vstv %s253
        %v255 = vadd.f32 %v252, %v254
        %s256 = scalar_lea.vmem %s199, 2 [#allocation2]
        %v257 = vld [vmem:[%s256] sm:$0x3]
        %s258 = sld [smem:[#allocation7 + $0x1]]
        %v259 = vstv %s258
        %v260 = vmul.f32 %v257, %v259
        %v261 = vadd.f32 %v237, %v260
        %s262 = sld [smem:[#allocation7 + $0x81]]
        %v263 = vstv %s262
        %v264 = vmul.f32 %v257, %v263
        %v265 = vadd.f32 %v243, %v264
        %s266 = sld [smem:[#allocation7 + $0x101]]
        %v267 = vstv %s266
        %v268 = vmul.f32 %v257, %v267
        %v269 = vadd.f32 %v249, %v268
        %s270 = sld [smem:[#allocation7 + $0x181]]
        %v271 = vstv %s270
        %v272 = vmul.f32 %v257, %v271
        %v273 = vadd.f32 %v255, %v272
        %s274 = scalar_lea.vmem %s199, 4 [#allocation2]
        %v275 = vld [vmem:[%s274] sm:$0x3]
        %s276 = sld [smem:[#allocation7 + $0x2]]
        %v277 = vstv %s276
        %v278 = vmul.f32 %v275, %v277
        %v279 = vadd.f32 %v261, %v278
        %s280 = sld [smem:[#allocation7 + $0x82]]
        %v281 = vstv %s280
        %v282 = vmul.f32 %v275, %v281
        %v283 = vadd.f32 %v265, %v282
        %s284 = sld [smem:[#allocation7 + $0x102]]
        %v285 = vstv %s284
        %v286 = vmul.f32 %v275, %v285
        %v287 = vadd.f32 %v269, %v286
        %s288 = sld [smem:[#allocation7 + $0x182]]
        %v289 = vstv %s288
        %v290 = vmul.f32 %v275, %v289
        %v291 = vadd.f32 %v273, %v290
        %s292 = scalar_lea.vmem %s199, 6 [#allocation2]
        %v293 = vld [vmem:[%s292] sm:$0x3]
        %s294 = sld [smem:[#allocation7 + $0x3]]
        %v295 = vstv %s294
        %v296 = vmul.f32 %v293, %v295
        %v297 = vadd.f32 %v279, %v296
        %s298 = sld [smem:[#allocation7 + $0x83]]
        %v299 = vstv %s298
        %v300 = vmul.f32 %v293, %v299
        %v301 = vadd.f32 %v283, %v300
        %s302 = sld [smem:[#allocation7 + $0x103]]
        %v303 = vstv %s302
        %v304 = vmul.f32 %v293, %v303
        %v305 = vadd.f32 %v287, %v304
        %s306 = sld [smem:[#allocation7 + $0x183]]
        %v307 = vstv %s306
        %v308 = vmul.f32 %v293, %v307
        %v309 = vadd.f32 %v291, %v308
        %s310 = scalar_lea.vmem %s199, 8 [#allocation2]
        %v311 = vld [vmem:[%s310] sm:$0x3]
        %s312 = sld [smem:[#allocation7 + $0x4]]
        %v313 = vstv %s312
        %v314 = vmul.f32 %v311, %v313
        %v315 = vadd.f32 %v297, %v314
        %s316 = sld [smem:[#allocation7 + $0x84]]
        %v317 = vstv %s316
        %v318 = vmul.f32 %v311, %v317
        %v319 = vadd.f32 %v301, %v318
        %s320 = sld [smem:[#allocation7 + $0x104]]
        %v321 = vstv %s320
        %v322 = vmul.f32 %v311, %v321
        %v323 = vadd.f32 %v305, %v322
        %s324 = sld [smem:[#allocation7 + $0x184]]
        %v325 = vstv %s324
        %v326 = vmul.f32 %v311, %v325
        %v327 = vadd.f32 %v309, %v326
        %s328 = scalar_lea.vmem %s199, 10 [#allocation2]
        %v329 = vld [vmem:[%s328] sm:$0x3]
        %s330 = sld [smem:[#allocation7 + $0x5]]
        %v331 = vstv %s330
        %v332 = vmul.f32 %v329, %v331
        %v333 = vadd.f32 %v315, %v332
        %s334 = sld [smem:[#allocation7 + $0x85]]
        %v335 = vstv %s334
        %v336 = vmul.f32 %v329, %v335
        %v337 = vadd.f32 %v319, %v336
        %s338 = sld [smem:[#allocation7 + $0x105]]
        %v339 = vstv %s338
        %v340 = vmul.f32 %v329, %v339
        %v341 = vadd.f32 %v323, %v340
        %s342 = sld [smem:[#allocation7 + $0x185]]
        %v343 = vstv %s342
        %v344 = vmul.f32 %v329, %v343
        %v345 = vadd.f32 %v327, %v344
        %s346 = scalar_lea.vmem %s199, 12 [#allocation2]
        %v347 = vld [vmem:[%s346] sm:$0x3]
        %s348 = sld [smem:[#allocation7 + $0x6]]
        %v349 = vstv %s348
        %v350 = vmul.f32 %v347, %v349
        %v351 = vadd.f32 %v333, %v350
        %s352 = sld [smem:[#allocation7 + $0x86]]
        %v353 = vstv %s352
        %v354 = vmul.f32 %v347, %v353
        %v355 = vadd.f32 %v337, %v354
        %s356 = sld [smem:[#allocation7 + $0x106]]
        %v357 = vstv %s356
        %v358 = vmul.f32 %v347, %v357
        %v359 = vadd.f32 %v341, %v358
        %s360 = sld [smem:[#allocation7 + $0x186]]
        %v361 = vstv %s360
        %v362 = vmul.f32 %v347, %v361
        %v363 = vadd.f32 %v345, %v362
        %s364 = scalar_lea.vmem %s199, 14 [#allocation2]
        %v365 = vld [vmem:[%s364] sm:$0x3]
        %s366 = sld [smem:[#allocation7 + $0x7]]
        %v367 = vstv %s366
        %v368 = vmul.f32 %v365, %v367
        %v369 = vadd.f32 %v351, %v368
        %s370 = sld [smem:[#allocation7 + $0x87]]
        %v371 = vstv %s370
        %v372 = vmul.f32 %v365, %v371
        %v373 = vadd.f32 %v355, %v372
        %s374 = sld [smem:[#allocation7 + $0x107]]
        %v375 = vstv %s374
        %v376 = vmul.f32 %v365, %v375
        %v377 = vadd.f32 %v359, %v376
        %s378 = sld [smem:[#allocation7 + $0x187]]
        %v379 = vstv %s378
        %v380 = vmul.f32 %v365, %v379
        %v381 = vadd.f32 %v363, %v380
        %382 = vst [vmem:[%s230] sm:$0x3] %v369
        %s383 = scalar_lea.vmem %s230, 2 [#allocation9]
        %384 = vst [vmem:[%s383] sm:$0x3] %v373
        %s385 = scalar_lea.vmem %s230, 4 [#allocation9]
        %386 = vst [vmem:[%s385] sm:$0x3] %v377
        %s387 = scalar_lea.vmem %s230, 6 [#allocation9]
        %388 = vst [vmem:[%s387] sm:$0x3] %v381
        %s389 = sand.u32 %s114, 1
        %s390 = scalar_lea.sflag [#allocation4], %s389
        %s391 = sand.u32 %s114, 1
        %s392 = smul.addr %s391, 8
        %s393 = scalar_lea.vmem [#allocation9], %s392
        // Predicated region
        $region45: #{tpu_custom_call.1} parent=31 // pred_check
          %p394 = pneg %p124
        $region46: #{tpu_custom_call.1} parent=31 // pred_check_branch
          %396 = sbr.rel (%p394) target = $region48
        $region47: #{tpu_custom_call.1} parent=31 // pred_region
          %s398 = ssub.s32 128, 128
          %399 = vsyncadd %s390, %s398
          %s400 = smul.addr %s26, 4
          %s401 = sadd.s32 %s27, %s400
          %s402 = smul.addr %s401, 32
          %s403 = scalar_lea.hbm %s3, %s402
          %s404 = sshll.u32 %s393, 4
          %s405 = int_to_ptr.vmem [resolvable:$true] %s404
          %410 = dma.vmem_to_hbm [thread:$0]  %s405, 128, %s403, %s390, 32, 32, 2
        $region48: #{tpu_custom_call.1} parent=31 // pred_fallthru
          _
      $region32: #{tpu_custom_call.1} parent=5 // pred_fallthru
        _
      %p411 = scmp.le.s32.totalorder 2, %s17
      // Predicated region
      $region49: #{tpu_custom_call.1} parent=5 // pred_check
        %p412 = pneg %p411
      $region50: #{tpu_custom_call.1} parent=5 // pred_check_branch
        %414 = sbr.rel (%p412) target = $region52
      $region51: #{tpu_custom_call.1} parent=5 // pred_region
        %s415 = ssub.s32 %s17, 2
        // Predicated region
        $region53: #{tpu_custom_call.1} parent=51 // pred_check
          %p416 = pneg %p130
        $region54: #{tpu_custom_call.1} parent=51 // pred_check_branch
          %418 = sbr.rel (%p416) target = $region56
        $region55: #{tpu_custom_call.1} parent=51 // pred_region
          %s419 = sand.u32 %s115, 1
          %s420 = scalar_lea.sflag [#allocation4], %s419
          %s421 = sand.u32 %s115, 1
          %s422 = smul.addr %s421, 8
          %s423 = scalar_lea.vmem [#allocation9], %s422
          %424 = dma.done %s420, 128
        $region56: #{tpu_custom_call.1} parent=51 // pred_fallthru
          _
      $region52: #{tpu_custom_call.1} parent=5 // pred_fallthru
        _
    $region6: #{tpu_custom_call.1} parent=1 // loop_footer
      %s21 = sadd.s32 1, %s17
    $region7: #{tpu_custom_call.1} parent=1 // loop_footer_branch
      %16 = sbr.rel target = $region3
    $region8: #{tpu_custom_call.1} parent=1 // loop_exit
      _
    %425 = vsyncpa [#allocation3], 1
    %s426 = scalar_lea.sflag [#allocation3], 1
    %427 = vsyncpa %s426, 1
    %428 = vsyncpa [#allocation4], 1
    %s429 = scalar_lea.sflag [#allocation4], 1
    %430 = vsyncpa %s429, 1
    %431 = vsyncpa [#allocation5], 1
    %s432 = scalar_lea.sflag [#allocation5], 1
    %433 = vsyncpa %s432, 1
    %434 = vsyncpa [#allocation6], 1
    %s435 = scalar_lea.sflag [#allocation6], 1
    %436 = vsyncpa %s435, 1

</llo_original>
